<compile_context>
chip_gen: v6e
topology: v6e:2x2x1
jax: 0.10.0
libtpu: 0.0.40
codegen_flags: <defaults>
</compile_context>

<pallas_src>
import functools
import math

import jax
import jax.numpy as jnp
from jax.experimental import pallas as pl
from jax.experimental.pallas import tpu as pltpu


def _gelu_exact(x):
    # ACT2FN["gelu"] in HF BERT is the exact (erf) GELU.
    return 0.5 * x * (1.0 + jax.lax.erf(x * (1.0 / math.sqrt(2.0))))


def _round_up(x, m):
    return (x + m - 1) // m * m


def _vmem_limit_bytes():
    # ~3/4 of physical VMEM: 48 MiB on v7x (64 MiB/TC), 96 MiB on v5e/v6e
    # (128 MiB), capped to leave compiler scratch headroom.
    try:
        cap = int(pltpu.get_tpu_info().vmem_capacity_bytes)
    except Exception:  # interpret mode / older jax: fall back to 128 MiB
        cap = 128 * 1024 * 1024
    return max(min((cap * 3) // 4, 112 * 1024 * 1024), 32 * 1024 * 1024)


# ---------------------------------------------------------------------------
# Fused kernel.
# Grid: (num_m, num_v); vocab innermost.  h scratch is (tm, H) bf16 and is
# recomputed once per row tile (j == 0), then reused for all vocab tiles.
# ---------------------------------------------------------------------------
def fused_head_kernel(x_ref, w1_ref, b1_ref, gamma_ref, beta_ref,
                      w2_ref, b2_ref, out_ref, h_ref, *, eps):
    @pl.when(pl.program_id(1) == 0)
    def _():
        # bf16 MXU operands, f32 accumulation; all pointwise math in f32.
        y = jnp.dot(x_ref[...], w1_ref[...],
                    preferred_element_type=jnp.float32)          # (tm, H)
        y = y + b1_ref[...]
        y = _gelu_exact(y)
        mean = jnp.mean(y, axis=-1, keepdims=True)
        var = jnp.mean(jnp.square(y - mean), axis=-1, keepdims=True)
        y = (y - mean) * jax.lax.rsqrt(var + eps)
        y = y * gamma_ref[...] + beta_ref[...]
        h_ref[...] = y.astype(h_ref.dtype)                        # bf16

    logits = jnp.dot(h_ref[...], w2_ref[...],
                     preferred_element_type=jnp.float32)          # (tm, tv)
    out_ref[...] = (logits + b2_ref[...]).astype(out_ref.dtype)


def prepare_params(w1, b1, gamma, beta, w2, bias):
    """One-time weight preparation, hoisted out of the per-call path.

    w1: (H, H), w2: (H, V) are the pre-transposed nn.Linear weights so the
    forward pass is x @ W.  Matmul operands go to bf16; bias / LayerNorm
    affine parameters stay f32 as (1, N) row vectors.
    """
    return dict(
        w1=w1.astype(jnp.bfloat16),
        b1=b1.reshape(1, -1).astype(jnp.float32),
        gamma=gamma.reshape(1, -1).astype(jnp.float32),
        beta=beta.reshape(1, -1).astype(jnp.float32),
        w2=w2.astype(jnp.bfloat16),
        bias=bias.reshape(1, -1).astype(jnp.float32),
    )


def bert_lm_prediction_head(x, params, *, eps=1e-12, tm=1024, tv=2048,
                            out_dtype=jnp.float32):
    """x: (B, S, H).  Returns logits (B, S, V) in out_dtype (default f32).
    TODO(synk): set out_dtype=bf16 if the downstream loss tolerates it (halves
    the dominant M*V store stream)."""
    B, S, H = x.shape
    V = params["w2"].shape[1]
    M = B * S

    # Row tile multiple of 8, vocab tile multiple of 128; ragged boundary
    # tiles are masked by Pallas on store (no input/output padding needed).
    tm = min(tm, _round_up(M, 8))
    tv = min(tv, _round_up(V, 128))
    num_m = pl.cdiv(M, tm)
    num_v = pl.cdiv(V, tv)

    x2d = x.reshape(M, H).astype(jnp.bfloat16)

    out = pl.pallas_call(
        functools.partial(fused_head_kernel, eps=eps),
        out_shape=jax.ShapeDtypeStruct((M, V), out_dtype),
        grid_spec=pltpu.PrefetchScalarGridSpec(
            num_scalar_prefetch=0,
            grid=(num_m, num_v),                               # vocab innermost
            in_specs=[
                pl.BlockSpec((tm, H), lambda i, j: (i, 0)),    # x rows (bf16)
                pl.BlockSpec((H, H), lambda i, j: (0, 0)),     # W1 resident
                pl.BlockSpec((1, H), lambda i, j: (0, 0)),     # b1
                pl.BlockSpec((1, H), lambda i, j: (0, 0)),     # gamma
                pl.BlockSpec((1, H), lambda i, j: (0, 0)),     # beta
                # Streamed operand; pipeline_mode=pl.Buffered(3) is an option
                # on v6e if profiles show exposed DMA.
                pl.BlockSpec((H, tv), lambda i, j: (0, j)),    # W2 (bf16)
                pl.BlockSpec((1, tv), lambda i, j: (0, j)),    # decoder bias
            ],
            out_specs=pl.BlockSpec((tm, tv), lambda i, j: (i, j)),
            scratch_shapes=[pltpu.VMEM((tm, H), jnp.bfloat16)],  # h tile
        ),
        compiler_params=pltpu.CompilerParams(
            dimension_semantics=("parallel", "arbitrary"),
            vmem_limit_bytes=_vmem_limit_bytes()),
    )(x2d, params["w1"], params["b1"], params["gamma"], params["beta"],
      params["w2"], params["bias"])

    return out.reshape(B, S, V)


# ---------------------------------------------------------------------------
# References.
# ---------------------------------------------------------------------------
def reference_forward_f32(x, w1, b1, gamma, beta, w2, bias, eps=1e-12):
    y = x @ w1 + b1
    y = _gelu_exact(y)
    mean = jnp.mean(y, axis=-1, keepdims=True)
    var = jnp.mean(jnp.square(y - mean), axis=-1, keepdims=True)
    y = (y - mean) * jax.lax.rsqrt(var + eps)
    y = y * gamma + beta
    return y @ w2 + bias


def reference_forward_mixed(x, w1, b1, gamma, beta, w2, bias, eps=1e-12):
    # Mirrors the kernel's dtype strategy (bf16 MXU operands, f32 elsewhere).
    y = jnp.dot(x.astype(jnp.bfloat16), w1.astype(jnp.bfloat16),
                preferred_element_type=jnp.float32) + b1
    y = _gelu_exact(y)
    mean = jnp.mean(y, axis=-1, keepdims=True)
    var = jnp.mean(jnp.square(y - mean), axis=-1, keepdims=True)
    y = (y - mean) * jax.lax.rsqrt(var + eps)
    h = (y * gamma + beta).astype(jnp.bfloat16)
    return jnp.dot(h, w2.astype(jnp.bfloat16),
                   preferred_element_type=jnp.float32) + bias


if __name__ == "__main__":
    # Small, BERT-shaped config.
    batch, seq, hidden, vocab = 2, 8, 128, 512
    eps = 1e-12

    key = jax.random.PRNGKey(0)
    k_x, k_w1, k_b1, k_g, k_bt, k_w2, k_bias = jax.random.split(key, 7)

    x = jax.random.normal(k_x, (batch, seq, hidden), jnp.float32)
    # Dense (hidden -> hidden), stored (H, H) so forward is x @ W1 + b1.
    w1 = jax.random.normal(k_w1, (hidden, hidden), jnp.float32) / math.sqrt(hidden)
    b1 = jax.random.normal(k_b1, (hidden,), jnp.float32) * 0.02
    # LayerNorm params (perturbed so the affine path is exercised).
    gamma = 1.0 + 0.1 * jax.random.normal(k_g, (hidden,), jnp.float32)
    beta = 0.1 * jax.random.normal(k_bt, (hidden,), jnp.float32)
    # Decoder (hidden -> vocab), stored (H, V); bias is the tied Parameter.
    w2 = jax.random.normal(k_w2, (hidden, vocab), jnp.float32) / math.sqrt(hidden)
    bias = 0.02 * jax.random.normal(k_bias, (vocab,), jnp.float32)

    # One-time weight prep (outside the per-forward path).
    params = prepare_params(w1, b1, gamma, beta, w2, bias)
    fwd = jax.jit(functools.partial(bert_lm_prediction_head, eps=eps))

    logits = jax.block_until_ready(fwd(x, params))
    assert logits.shape == (batch, seq, vocab)

    ref_mixed = reference_forward_mixed(x, w1, b1, gamma, beta, w2, bias, eps=eps)
    ref_f32 = reference_forward_f32(x, w1, b1, gamma, beta, w2, bias, eps=eps)

    err_mixed = float(jnp.max(jnp.abs(logits - ref_mixed)))
    err_f32 = float(jnp.max(jnp.abs(logits - ref_f32)))
    # Apples-to-apples (same bf16 casting) check: tight.
    assert jnp.allclose(logits, ref_mixed, atol=2e-2, rtol=2e-2), err_mixed
    # Against the pure-f32 reference: loose (bf16 MXU operands on both matmuls).
    assert jnp.allclose(logits, ref_f32, atol=2e-1, rtol=2e-1), err_f32

    print("KERNEL_OK")
</pallas_src>

<mosaic_0001>
module attributes {stable_mosaic.version = 11 : i64} {
  func.func @fused_head_kernel(%arg0: i32, %arg1: i32, %arg2: memref<16x128xbf16, #tpu.memory_space<vmem>>, %arg3: memref<128x128xbf16, #tpu.memory_space<vmem>>, %arg4: memref<1x128xf32, #tpu.memory_space<vmem>>, %arg5: memref<1x128xf32, #tpu.memory_space<vmem>>, %arg6: memref<1x128xf32, #tpu.memory_space<vmem>>, %arg7: memref<128x512xbf16, #tpu.memory_space<vmem>>, %arg8: memref<1x512xf32, #tpu.memory_space<vmem>>, %arg9: memref<16x512xf32, #tpu.memory_space<vmem>>, %arg10: memref<16x128xbf16, #tpu.memory_space<vmem>>) attributes {dimension_semantics = [#tpu.dimension_semantics<parallel>, #tpu.dimension_semantics<arbitrary>], iteration_bounds = array<i64: 1, 1>, scalar_prefetch = 0 : i64, scratch_operands = 1 : i64, tpu.core_type = #tpu.core_type<tc>, window_params = [{transform_indices = @transform_0, window_bounds = array<i64: 16, 128>}, {pipeline_mode = #tpu.pipeline_mode<synchronous>, transform_indices = @transform_1, window_bounds = array<i64: 128, 128>}, {pipeline_mode = #tpu.pipeline_mode<synchronous>, transform_indices = @transform_2, window_bounds = array<i64: 1, 128>}, {pipeline_mode = #tpu.pipeline_mode<synchronous>, transform_indices = @transform_3, window_bounds = array<i64: 1, 128>}, {pipeline_mode = #tpu.pipeline_mode<synchronous>, transform_indices = @transform_4, window_bounds = array<i64: 1, 128>}, {transform_indices = @transform_5, window_bounds = array<i64: 128, 512>}, {transform_indices = @transform_6, window_bounds = array<i64: 1, 512>}, {transform_indices = @transform_7, window_bounds = array<i64: 16, 512>}]} {
    %c0_i32 = arith.constant 0 : i32
    %0 = arith.cmpi eq, %arg1, %c0_i32 : i32
    %1 = arith.extui %0 : i1 to i32
    %c0_i32_0 = arith.constant 0 : i32
    %2 = arith.cmpi ne, %1, %c0_i32_0 : i32
    scf.if %2 {
      %c0_8 = arith.constant 0 : index
      %c0_9 = arith.constant 0 : index
      %10 = vector.load %arg2[%c0_8, %c0_9] : memref<16x128xbf16, #tpu.memory_space<vmem>>, vector<16x128xbf16>
      %c0_10 = arith.constant 0 : index
      %c0_11 = arith.constant 0 : index
      %11 = vector.load %arg3[%c0_10, %c0_11] : memref<128x128xbf16, #tpu.memory_space<vmem>>, vector<128x128xbf16>
      %cst_12 = arith.constant dense<0.000000e+00> : vector<16x128xf32>
      %12 = tpu.matmul %10, %11, %cst_12 {dimension_numbers = #tpu.dot_dimension_numbers<[1], [0], [0], [1], [0, 0, 1, 1], [], []>} : vector<16x128xbf16>, vector<128x128xbf16>, vector<16x128xf32> -> vector<16x128xf32>
      %c0_13 = arith.constant 0 : index
      %c0_14 = arith.constant 0 : index
      %13 = vector.load %arg4[%c0_13, %c0_14] : memref<1x128xf32, #tpu.memory_space<vmem>>, vector<1x128xf32>
      %14 = vector.broadcast %13 : vector<1x128xf32> to vector<16x128xf32>
      %15 = arith.addf %12, %14 : vector<16x128xf32>
      %cst_15 = arith.constant 5.000000e-01 : f32
      %16 = vector.broadcast %cst_15 : f32 to vector<16x128xf32>
      %17 = arith.mulf %16, %15 : vector<16x128xf32>
      %cst_16 = arith.constant 0.707106769 : f32
      %18 = vector.broadcast %cst_16 : f32 to vector<16x128xf32>
      %19 = arith.mulf %15, %18 : vector<16x128xf32>
      %20 = math.erf %19 : vector<16x128xf32>
      %cst_17 = arith.constant 1.000000e+00 : f32
      %21 = vector.broadcast %cst_17 : f32 to vector<16x128xf32>
      %22 = arith.addf %21, %20 : vector<16x128xf32>
      %23 = arith.mulf %17, %22 : vector<16x128xf32>
      %cst_18 = arith.constant dense<0.000000e+00> : vector<16xf32>
      %24 = vector.multi_reduction <add>, %23, %cst_18 [1] : vector<16x128xf32> to vector<16xf32>
      %25 = vector.shape_cast %24 : vector<16xf32> to vector<16x1xf32>
      %cst_19 = arith.constant 1.280000e+02 : f32
      %26 = vector.broadcast %cst_19 : f32 to vector<16x1xf32>
      %27 = arith.divf %25, %26 : vector<16x1xf32>
      %28 = vector.broadcast %27 : vector<16x1xf32> to vector<16x128xf32>
      %29 = arith.subf %23, %28 : vector<16x128xf32>
      %30 = arith.mulf %29, %29 : vector<16x128xf32>
      %cst_20 = arith.constant dense<0.000000e+00> : vector<16xf32>
      %31 = vector.multi_reduction <add>, %30, %cst_20 [1] : vector<16x128xf32> to vector<16xf32>
      %32 = vector.shape_cast %31 : vector<16xf32> to vector<16x1xf32>
      %cst_21 = arith.constant 1.280000e+02 : f32
      %33 = vector.broadcast %cst_21 : f32 to vector<16x1xf32>
      %34 = arith.divf %32, %33 : vector<16x1xf32>
      %35 = vector.broadcast %27 : vector<16x1xf32> to vector<16x128xf32>
      %36 = arith.subf %23, %35 : vector<16x128xf32>
      %cst_22 = arith.constant 9.99999996E-13 : f32
      %37 = vector.broadcast %cst_22 : f32 to vector<16x1xf32>
      %38 = arith.addf %34, %37 : vector<16x1xf32>
      %39 = math.rsqrt %38 : vector<16x1xf32>
      %40 = vector.broadcast %39 : vector<16x1xf32> to vector<16x128xf32>
      %41 = arith.mulf %36, %40 : vector<16x128xf32>
      %c0_23 = arith.constant 0 : index
      %c0_24 = arith.constant 0 : index
      %42 = vector.load %arg5[%c0_23, %c0_24] : memref<1x128xf32, #tpu.memory_space<vmem>>, vector<1x128xf32>
      %43 = vector.broadcast %42 : vector<1x128xf32> to vector<16x128xf32>
      %44 = arith.mulf %41, %43 : vector<16x128xf32>
      %c0_25 = arith.constant 0 : index
      %c0_26 = arith.constant 0 : index
      %45 = vector.load %arg6[%c0_25, %c0_26] : memref<1x128xf32, #tpu.memory_space<vmem>>, vector<1x128xf32>
      %46 = vector.broadcast %45 : vector<1x128xf32> to vector<16x128xf32>
      %47 = arith.addf %44, %46 : vector<16x128xf32>
      %48 = arith.truncf %47 : vector<16x128xf32> to vector<16x128xbf16>
      %c0_27 = arith.constant 0 : index
      %c0_28 = arith.constant 0 : index
      %49 = vector.load %arg10[%c0_27, %c0_28] : memref<16x128xbf16, #tpu.memory_space<vmem>>, vector<16x128xbf16>
      tpu.vector_store %arg10[%c0_27, %c0_28], %48 {strides = array<i32>} : memref<16x128xbf16, #tpu.memory_space<vmem>>, vector<16x128xbf16>,
    } else {
    }
    %c0 = arith.constant 0 : index
    %c0_1 = arith.constant 0 : index
    %3 = vector.load %arg10[%c0, %c0_1] : memref<16x128xbf16, #tpu.memory_space<vmem>>, vector<16x128xbf16>
    %c0_2 = arith.constant 0 : index
    %c0_3 = arith.constant 0 : index
    %4 = vector.load %arg7[%c0_2, %c0_3] : memref<128x512xbf16, #tpu.memory_space<vmem>>, vector<128x512xbf16>
    %cst = arith.constant dense<0.000000e+00> : vector<16x512xf32>
    %5 = tpu.matmul %3, %4, %cst {dimension_numbers = #tpu.dot_dimension_numbers<[1], [0], [0], [1], [0, 0, 1, 1], [], []>} : vector<16x128xbf16>, vector<128x512xbf16>, vector<16x512xf32> -> vector<16x512xf32>
    %c0_4 = arith.constant 0 : index
    %c0_5 = arith.constant 0 : index
    %6 = vector.load %arg8[%c0_4, %c0_5] : memref<1x512xf32, #tpu.memory_space<vmem>>, vector<1x512xf32>
    %7 = vector.broadcast %6 : vector<1x512xf32> to vector<16x512xf32>
    %8 = arith.addf %5, %7 : vector<16x512xf32>
    %c0_6 = arith.constant 0 : index
    %c0_7 = arith.constant 0 : index
    %9 = vector.load %arg9[%c0_6, %c0_7] : memref<16x512xf32, #tpu.memory_space<vmem>>, vector<16x512xf32>
    tpu.vector_store %arg9[%c0_6, %c0_7], %8 {strides = array<i32>} : memref<16x512xf32, #tpu.memory_space<vmem>>, vector<16x512xf32>,
    return
  }
  func.func @transform_0(%arg0: i32, %arg1: i32) -> (i32, i32) {
    %c0_i32 = arith.constant 0 : i32
    %c0_i32_0 = arith.constant 0 : i32
    return %arg0, %c0_i32 : i32, i32
  }
  func.func @transform_1(%arg0: i32, %arg1: i32) -> (i32, i32) {
    %c0_i32 = arith.constant 0 : i32
    %c0_i32_0 = arith.constant 0 : i32
    %c0_i32_1 = arith.constant 0 : i32
    return %c0_i32, %c0_i32_0 : i32, i32
  }
  func.func @transform_2(%arg0: i32, %arg1: i32) -> (i32, i32) {
    %c0_i32 = arith.constant 0 : i32
    %c0_i32_0 = arith.constant 0 : i32
    %c0_i32_1 = arith.constant 0 : i32
    return %c0_i32, %c0_i32_0 : i32, i32
  }
  func.func @transform_3(%arg0: i32, %arg1: i32) -> (i32, i32) {
    %c0_i32 = arith.constant 0 : i32
    %c0_i32_0 = arith.constant 0 : i32
    %c0_i32_1 = arith.constant 0 : i32
    return %c0_i32, %c0_i32_0 : i32, i32
  }
  func.func @transform_4(%arg0: i32, %arg1: i32) -> (i32, i32) {
    %c0_i32 = arith.constant 0 : i32
    %c0_i32_0 = arith.constant 0 : i32
    %c0_i32_1 = arith.constant 0 : i32
    return %c0_i32, %c0_i32_0 : i32, i32
  }
  func.func @transform_5(%arg0: i32, %arg1: i32) -> (i32, i32) {
    %c0_i32 = arith.constant 0 : i32
    %c0_i32_0 = arith.constant 0 : i32
    return %c0_i32, %arg1 : i32, i32
  }
  func.func @transform_6(%arg0: i32, %arg1: i32) -> (i32, i32) {
    %c0_i32 = arith.constant 0 : i32
    %c0_i32_0 = arith.constant 0 : i32
    return %c0_i32, %arg1 : i32, i32
  }
  func.func @transform_7(%arg0: i32, %arg1: i32) -> (i32, i32) {
    %c0_i32 = arith.constant 0 : i32
    return %arg0, %arg1 : i32, i32
  }
}

</mosaic_0001>

<llo_original>
// kernel: bert_lm_prediction_head.1
$region0: #{bert_lm_prediction_head.1}
  #allocation0 [shape = 'u32[]', space=smem, size = 0x4, offset = 0x4, fixed_abs, tag = 'smem constant byte address 0x4 - core index']
  #allocation1 [shape = 'u32[144,128]{1,0:T(1,128)}', space=vmem, size = 0x12000, scoped, tag = 'internal scratch']
  #allocation2 [shape = 'bf16[16,128]{1,0:T(8,128)(2,1)}', space=vmem, size = 0x1000, scoped, tag = 'scratch operand']
  %s0 = inlined_call_operand.vmem [shape: bf16[16,128], index: 0, kind: input, shape index: {}]
  %s1 = inlined_call_operand.hbm [shape: bf16[128,128], index: 1, kind: input, shape index: {}]
  %s2 = inlined_call_operand.vmem [shape: f32[1,128], index: 2, kind: input, shape index: {}]
  %s3 = inlined_call_operand.vmem [shape: f32[1,128], index: 3, kind: input, shape index: {}]
  %s4 = inlined_call_operand.vmem [shape: f32[1,128], index: 4, kind: input, shape index: {}]
  %s5 = inlined_call_operand.hbm [shape: bf16[128,512], index: 5, kind: input, shape index: {}]
  %s6 = inlined_call_operand.vmem [shape: f32[1,512], index: 6, kind: input, shape index: {}]
  %s7 = inlined_call_operand.hbm [shape: f32[16,512], index: 7, kind: output, shape index: {}]
  %s8 = sld [smem:[#allocation0]]
  $region50: #{bert_lm_prediction_head.1} parent=0
    _
  %s10 = ssub.s32 1, %s8
  %s11 = scalar_select 0, %s10, %s8
  $region1: #{bert_lm_prediction_head.1} parent=0
    #allocation3 [shape = 'u8[32768]{0}', space=vmem, size = 0x8000, scoped, tag = 'input window, operand 1, single buffered']
    #allocation4 [shape = 's32[1]{0}', space=sflag, size = 0x4, scoped, tag = 'scoped memory for bert_lm_prediction_head.1']
    #allocation5 [shape = 's32[1]{0}', space=sflag, size = 0x4, scoped, tag = 'scoped memory for bert_lm_prediction_head.1']
    #allocation6 [shape = 'u8[131072]{0}', space=vmem, size = 0x20000, scoped, tag = 'input window, operand 5, single buffered']
    #allocation7 [shape = 's32[1]{0}', space=sflag, size = 0x4, scoped, tag = 'scoped memory for bert_lm_prediction_head.1']
    #allocation8 [shape = 'u8[32768]{0}', space=vmem, size = 0x8000, scoped, tag = 'output window, operand 0, single buffered']
    %12 = vsyncpa [#allocation4], 0
    %13 = vsyncpa [#allocation7], 0
    %14 = vsyncpa [#allocation5], 0
    // Predicated region
    $region2: #{bert_lm_prediction_head.1} parent=1 // pred_check
      _
    $region3: #{bert_lm_prediction_head.1} parent=1 // pred_check_branch
      %16 = sbr.rel (0) target = $region5
    $region4: #{bert_lm_prediction_head.1} parent=1 // pred_region
      _
    $region5: #{bert_lm_prediction_head.1} parent=1 // pred_fallthru
      _
    // Predicated region
    $region6: #{bert_lm_prediction_head.1} parent=1 // pred_check
      _
    $region7: #{bert_lm_prediction_head.1} parent=1 // pred_check_branch
      %18 = sbr.rel (0) target = $region9
    $region8: #{bert_lm_prediction_head.1} parent=1 // pred_region
      %s20 = ssub.s32 1024, 1024
      %21 = vsyncadd [#allocation4], %s20
      %s22 = sshll.u32 [#allocation3], 4
      %s23 = int_to_ptr.vmem [resolvable:$true] %s22
      %28 = dma.hbm_to_vmem [thread:$0]  %s1, 1024, %s23, [#allocation4], 64, 64, 4
    $region9: #{bert_lm_prediction_head.1} parent=1 // pred_fallthru
      _
    // Predicated region
    $region10: #{bert_lm_prediction_head.1} parent=1 // pred_check
      _
    $region11: #{bert_lm_prediction_head.1} parent=1 // pred_check_branch
      %30 = sbr.rel (0) target = $region13
    $region12: #{bert_lm_prediction_head.1} parent=1 // pred_region
      _
    $region13: #{bert_lm_prediction_head.1} parent=1 // pred_fallthru
      _
    // Predicated region
    $region14: #{bert_lm_prediction_head.1} parent=1 // pred_check
      _
    $region15: #{bert_lm_prediction_head.1} parent=1 // pred_check_branch
      %32 = sbr.rel (0) target = $region17
    $region16: #{bert_lm_prediction_head.1} parent=1 // pred_region
      _
    $region17: #{bert_lm_prediction_head.1} parent=1 // pred_fallthru
      _
    // Predicated region
    $region18: #{bert_lm_prediction_head.1} parent=1 // pred_check
      _
    $region19: #{bert_lm_prediction_head.1} parent=1 // pred_check_branch
      %34 = sbr.rel (0) target = $region21
    $region20: #{bert_lm_prediction_head.1} parent=1 // pred_region
      _
    $region21: #{bert_lm_prediction_head.1} parent=1 // pred_fallthru
      _
    // Predicated region
    $region22: #{bert_lm_prediction_head.1} parent=1 // pred_check
      _
    $region23: #{bert_lm_prediction_head.1} parent=1 // pred_check_branch
      %36 = sbr.rel (0) target = $region25
    $region24: #{bert_lm_prediction_head.1} parent=1 // pred_region
      %s38 = ssub.s32 4096, 4096
      %39 = vsyncadd [#allocation7], %s38
      %s40 = sshll.u32 [#allocation6], 4
      %s41 = int_to_ptr.vmem [resolvable:$true] %s40
      %46 = dma.hbm_to_vmem [thread:$0]  %s5, 4096, %s41, [#allocation7], 256, 256, 16
    $region25: #{bert_lm_prediction_head.1} parent=1 // pred_fallthru
      _
    // Predicated region
    $region26: #{bert_lm_prediction_head.1} parent=1 // pred_check
      _
    $region27: #{bert_lm_prediction_head.1} parent=1 // pred_check_branch
      %48 = sbr.rel (0) target = $region29
    $region28: #{bert_lm_prediction_head.1} parent=1 // pred_region
      _
    $region29: #{bert_lm_prediction_head.1} parent=1 // pred_fallthru
      _
    // Predicated region
    $region30: #{bert_lm_prediction_head.1} parent=1 // pred_check
      _
    $region31: #{bert_lm_prediction_head.1} parent=1 // pred_check_branch
      %50 = sbr.rel (0) target = $region33
    $region32: #{bert_lm_prediction_head.1} parent=1 // pred_region
      %51 = dma.done [#allocation4], 1024
    $region33: #{bert_lm_prediction_head.1} parent=1 // pred_fallthru
      _
    // Predicated region
    $region34: #{bert_lm_prediction_head.1} parent=1 // pred_check
      _
    $region35: #{bert_lm_prediction_head.1} parent=1 // pred_check_branch
      %53 = sbr.rel (0) target = $region37
    $region36: #{bert_lm_prediction_head.1} parent=1 // pred_region
      %54 = dma.done [#allocation7], 4096
    $region37: #{bert_lm_prediction_head.1} parent=1 // pred_fallthru
      _
    %p56 = scmp.eq.s32.totalorder 0, 0
    // Predicated region
    $region38: #{bert_lm_prediction_head.1} parent=1 // pred_check
      %p57 = pneg %p56
    $region39: #{bert_lm_prediction_head.1} parent=1 // pred_check_branch
      %59 = sbr.rel (%p57) target = $region41
    $region40: #{bert_lm_prediction_head.1} parent=1 // pred_region
      %v60 = vld [vmem:[%s0] sm:$0xf]
      %v61 = vld [vmem:[%s0 + $0x4] sm:$0xf]
      %v62 = vld [vmem:[#allocation3] sm:$0xf]
      %v63 = vld [vmem:[#allocation3 + $0x4] sm:$0xf]
      %v64 = vld [vmem:[#allocation3 + $0x8] sm:$0xf]
      %v65 = vld [vmem:[#allocation3 + $0xc] sm:$0xf]
      %v66 = vld [vmem:[#allocation3 + $0x10] sm:$0xf]
      %v67 = vld [vmem:[#allocation3 + $0x14] sm:$0xf]
      %v68 = vld [vmem:[#allocation3 + $0x18] sm:$0xf]
      %v69 = vld [vmem:[#allocation3 + $0x1c] sm:$0xf]
      %v70 = vld [vmem:[#allocation3 + $0x20] sm:$0xf]
      %v71 = vld [vmem:[#allocation3 + $0x24] sm:$0xf]
      %v72 = vld [vmem:[#allocation3 + $0x28] sm:$0xf]
      %v73 = vld [vmem:[#allocation3 + $0x2c] sm:$0xf]
      %v74 = vld [vmem:[#allocation3 + $0x30] sm:$0xf]
      %v75 = vld [vmem:[#allocation3 + $0x34] sm:$0xf]
      %v76 = vld [vmem:[#allocation3 + $0x38] sm:$0xf]
      %v77 = vld [vmem:[#allocation3 + $0x3c] sm:$0xf]
      %v78 = vld [vmem:[%s2] sm:$0x1]
      %v80 = vlaneseq
      %v81 = vshrl.u32 %v80, 7
      %v82 = vsub.s32 0, %v81
      %v83 = vrot.slane %v78, %v82
      %v87 = vunpack.c.l.b16 %v60
      %v88 = vunpack.c.l.b16 %v61
      %v89 = vpack.c.b16 %v88, %v87
      %v107 = vunpack.c.l.b16 %v62
      %v108 = vunpack.c.l.b16 %v63
      %v109 = vunpack.c.l.b16 %v64
      %v110 = vunpack.c.l.b16 %v65
      %v111 = vunpack.c.l.b16 %v66
      %v112 = vunpack.c.l.b16 %v67
      %v113 = vunpack.c.l.b16 %v68
      %v114 = vunpack.c.l.b16 %v69
      %v115 = vunpack.c.l.b16 %v70
      %v116 = vunpack.c.l.b16 %v71
      %v117 = vunpack.c.l.b16 %v72
      %v118 = vunpack.c.l.b16 %v73
      %v119 = vunpack.c.l.b16 %v74
      %v120 = vunpack.c.l.b16 %v75
      %v121 = vunpack.c.l.b16 %v76
      %v122 = vunpack.c.l.b16 %v77
      %v123 = vpack.c.b16 %v108, %v107
      %v124 = vpack.c.b16 %v110, %v109
      %v125 = vpack.c.b16 %v112, %v111
      %v126 = vpack.c.b16 %v114, %v113
      %v127 = vpack.c.b16 %v116, %v115
      %v128 = vpack.c.b16 %v118, %v117
      %v129 = vpack.c.b16 %v120, %v119
      %v130 = vpack.c.b16 %v122, %v121
      %139 = vmatprep.subr.bf16.mxu0 0
      %140 = vmatpush1.bf16.msra.mxu0 %v130
      %141 = vmatprep.subr.bf16.mxu0 0
      %142 = vmatpush1.bf16.msra.mxu0 %v129
      %143 = vmatprep.subr.bf16.mxu0 0
      %144 = vmatpush1.bf16.msra.mxu0 %v128
      %145 = vmatprep.subr.bf16.mxu0 0
      %146 = vmatpush1.bf16.msra.mxu0 %v127
      %147 = vmatprep.subr.bf16.mxu0 0
      %148 = vmatpush1.bf16.msra.mxu0 %v126
      %149 = vmatprep.subr.bf16.mxu0 0
      %150 = vmatpush1.bf16.msra.mxu0 %v125
      %151 = vmatprep.subr.bf16.mxu0 0
      %152 = vmatpush1.bf16.msra.mxu0 %v124
      %153 = vmatprep.subr.bf16.mxu0 0
      %154 = vmatpush1.bf16.msra.mxu0 %v123
      %155 = vmatprep.subr.bf16.mxu0 0
      %156 = vmatpush2.bf16.msra.mxu0 0
      %157 = vmatprep.subr.bf16.mxu0 0
      %158 = vmatpush2.bf16.msra.mxu0 0
      %159 = vmatprep.subr.bf16.mxu0 0
      %160 = vmatpush2.bf16.msra.mxu0 0
      %161 = vmatprep.subr.bf16.mxu0 0
      %162 = vmatpush2.bf16.msra.mxu0 0
      %163 = vmatprep.subr.bf16.mxu0 0
      %164 = vmatpush2.bf16.msra.mxu0 0
      %165 = vmatprep.subr.bf16.mxu0 0
      %166 = vmatpush2.bf16.msra.mxu0 0
      %167 = vmatprep.subr.bf16.mxu0 0
      %168 = vmatpush2.bf16.msra.mxu0 0
      %169 = vmatprep.subr.bf16.mxu0 0
      %170 = vmatpush2.bf16.msra.mxu0 0
      %171 = vmatprep.mubr.bf16.mxu0 0
      %172 = vmatmul.mubr.bf16.gmra.mxu0 %v89
      %v173 = vpop.f32.mrf.mxu0
      %v174 = vadd.f32 %v83, %v173
      %v175 = vpop.f32.mrf.mxu0
      %v176 = vpop.f32.mrf.mxu0
      %v177 = vadd.f32 %v83, %v176
      %v178 = vpop.f32.mrf.mxu0
      %179 = vdwg.mxu0
      %v180 = vmul.f32 %v174, 0.5
      %v181 = vmul.f32 %v177, 0.5
      %v182 = vmul.f32 %v174, 0.70710677
      %v183 = vmul.f32 %v177, 0.70710677
      %v184 = verf.f32.pop %v182
      %v185 = verf.f32.pop %v183
      %v186 = vadd.f32 %v184, 1.0
      %v187 = vadd.f32 %v185, 1.0
      %v188 = vmul.f32 %v180, %v186
      %v189 = vmul.f32 %v181, %v187
      %190 = vadd.xlane.f32.xlu0 %v188
      %v191 = vpop.xlane.xlu0 %190
      %192 = vadd.xlane.f32.xlu0 %v189
      %v193 = vpop.xlane.xlu0 %192
      %v194 = vrcp.pop 128.0
      %v195 = vmul.f32 %v191, %v194
      %v196 = vmul.f32 %v193, %v194
      %v197 = vsub.f32 %v188, %v195
      %v198 = vsub.f32 %v189, %v196
      %v199 = vmul.f32 %v197, %v197
      %v200 = vmul.f32 %v198, %v198
      %201 = vadd.xlane.f32.xlu0 %v199
      %v202 = vpop.xlane.xlu0 %201
      %203 = vadd.xlane.f32.xlu0 %v200
      %v204 = vpop.xlane.xlu0 %203
      %v205 = vmul.f32 %v202, %v194
      %v206 = vmul.f32 %v204, %v194
      %v207 = vadd.f32 %v205, 1e-12
      %v208 = vadd.f32 %v206, 1e-12
      %v209 = vrsqrt.pop %v207
      %v210 = vrsqrt.pop %v208
      %v211 = vmul.f32 %v197, %v209
      %v212 = vmul.f32 %v198, %v210
      %v213 = vld [vmem:[%s3] sm:$0x1]
      %v215 = vlaneseq
      %v216 = vshrl.u32 %v215, 7
      %v217 = vsub.s32 0, %v216
      %v218 = vrot.slane %v213, %v217
      %v220 = vmul.f32 %v211, %v218
      %v221 = vmul.f32 %v212, %v218
      %v222 = vld [vmem:[%s4] sm:$0x1]
      %v224 = vlaneseq
      %v225 = vshrl.u32 %v224, 7
      %v226 = vsub.s32 0, %v225
      %v227 = vrot.slane %v222, %v226
      %v229 = vadd.f32 %v220, %v227
      %v230 = vadd.f32 %v221, %v227
      %v231 = vpack.c.bf16 %v230, %v229
      %v233 = vunpack.c.l.b16 %v231
      %v234 = vunpack.c.h.b16 %v231
      %v235 = vpack.c.b16 %v233, %v233
      %v236 = vpack.c.b16 %v234, %v234
      %239 = vst [vmem:[#allocation2] sm:$0xf] %v235
      %240 = vst [vmem:[#allocation2 + $0x4] sm:$0xf] %v236
    $region41: #{bert_lm_prediction_head.1} parent=1 // pred_fallthru
      _
    %v241 = vld [vmem:[#allocation2] sm:$0xf]
    %v242 = vld [vmem:[#allocation2 + $0x4] sm:$0xf]
    %v243 = vld [vmem:[#allocation6] sm:$0xff]
    %v244 = vld [vmem:[#allocation6 + $0x8] sm:$0xff]
    %v245 = vld [vmem:[#allocation6 + $0x10] sm:$0xff]
    %v246 = vld [vmem:[#allocation6 + $0x18] sm:$0xff]
    %v247 = vld [vmem:[#allocation6 + $0x20] sm:$0xff]
    %v248 = vld [vmem:[#allocation6 + $0x28] sm:$0xff]
    %v249 = vld [vmem:[#allocation6 + $0x30] sm:$0xff]
    %v250 = vld [vmem:[#allocation6 + $0x38] sm:$0xff]
    %v251 = vld [vmem:[#allocation6 + $0x40] sm:$0xff]
    %v252 = vld [vmem:[#allocation6 + $0x48] sm:$0xff]
    %v253 = vld [vmem:[#allocation6 + $0x50] sm:$0xff]
    %v254 = vld [vmem:[#allocation6 + $0x58] sm:$0xff]
    %v255 = vld [vmem:[#allocation6 + $0x60] sm:$0xff]
    %v256 = vld [vmem:[#allocation6 + $0x68] sm:$0xff]
    %v257 = vld [vmem:[#allocation6 + $0x70] sm:$0xff]
    %v258 = vld [vmem:[#allocation6 + $0x78] sm:$0xff]
    %v259 = vld [vmem:[#allocation6 + $0x80] sm:$0xff]
    %v260 = vld [vmem:[#allocation6 + $0x88] sm:$0xff]
    %v261 = vld [vmem:[#allocation6 + $0x90] sm:$0xff]
    %v262 = vld [vmem:[#allocation6 + $0x98] sm:$0xff]
    %v263 = vld [vmem:[#allocation6 + $0xa0] sm:$0xff]
    %v264 = vld [vmem:[#allocation6 + $0xa8] sm:$0xff]
    %v265 = vld [vmem:[#allocation6 + $0xb0] sm:$0xff]
    %v266 = vld [vmem:[#allocation6 + $0xb8] sm:$0xff]
    %v267 = vld [vmem:[#allocation6 + $0xc0] sm:$0xff]
    %v268 = vld [vmem:[#allocation6 + $0xc8] sm:$0xff]
    %v269 = vld [vmem:[#allocation6 + $0xd0] sm:$0xff]
    %v270 = vld [vmem:[#allocation6 + $0xd8] sm:$0xff]
    %v271 = vld [vmem:[#allocation6 + $0xe0] sm:$0xff]
    %v272 = vld [vmem:[#allocation6 + $0xe8] sm:$0xff]
    %v273 = vld [vmem:[#allocation6 + $0xf0] sm:$0xff]
    %v274 = vld [vmem:[#allocation6 + $0xf8] sm:$0xff]
    %v275 = vld [vmem:[%s6] sm:$0xf]
    %v277 = vlaneseq
    %v278 = vshrl.u32 %v277, 7
    %v279 = vsub.s32 0, %v278
    %v280 = vrot.slane %v275, %v279
    %v281 = vlaneseq
    %v282 = vshrl.u32 %v281, 7
    %v283 = vsub.s32 1, %v282
    %v284 = vrot.slane %v275, %v283
    %v285 = vlaneseq
    %v286 = vshrl.u32 %v285, 7
    %v287 = vsub.s32 2, %v286
    %v288 = vrot.slane %v275, %v287
    %v289 = vlaneseq
    %v290 = vshrl.u32 %v289, 7
    %v291 = vsub.s32 3, %v290
    %v292 = vrot.slane %v275, %v291
    %v299 = vunpack.c.l.b16 %v241
    %v300 = vunpack.c.l.b16 %v242
    %v301 = vpack.c.b16 %v300, %v299
    %v335 = vunpack.c.l.b16 %v243
    %v336 = vunpack.c.h.b16 %v243
    %v337 = vunpack.c.l.b16 %v244
    %v338 = vunpack.c.h.b16 %v244
    %v339 = vunpack.c.l.b16 %v245
    %v340 = vunpack.c.h.b16 %v245
    %v341 = vunpack.c.l.b16 %v246
    %v342 = vunpack.c.h.b16 %v246
    %v343 = vunpack.c.l.b16 %v247
    %v344 = vunpack.c.h.b16 %v247
    %v345 = vunpack.c.l.b16 %v248
    %v346 = vunpack.c.h.b16 %v248
    %v347 = vunpack.c.l.b16 %v249
    %v348 = vunpack.c.h.b16 %v249
    %v349 = vunpack.c.l.b16 %v250
    %v350 = vunpack.c.h.b16 %v250
    %v351 = vunpack.c.l.b16 %v251
    %v352 = vunpack.c.h.b16 %v251
    %v353 = vunpack.c.l.b16 %v252
    %v354 = vunpack.c.h.b16 %v252
    %v355 = vunpack.c.l.b16 %v253
    %v356 = vunpack.c.h.b16 %v253
    %v357 = vunpack.c.l.b16 %v254
    %v358 = vunpack.c.h.b16 %v254
    %v359 = vunpack.c.l.b16 %v255
    %v360 = vunpack.c.h.b16 %v255
    %v361 = vunpack.c.l.b16 %v256
    %v362 = vunpack.c.h.b16 %v256
    %v363 = vunpack.c.l.b16 %v257
    %v364 = vunpack.c.h.b16 %v257
    %v365 = vunpack.c.l.b16 %v258
    %v366 = vunpack.c.h.b16 %v258
    %v367 = vunpack.c.l.b16 %v259
    %v368 = vunpack.c.h.b16 %v259
    %v369 = vunpack.c.l.b16 %v260
    %v370 = vunpack.c.h.b16 %v260
    %v371 = vunpack.c.l.b16 %v261
    %v372 = vunpack.c.h.b16 %v261
    %v373 = vunpack.c.l.b16 %v262
    %v374 = vunpack.c.h.b16 %v262
    %v375 = vunpack.c.l.b16 %v263
    %v376 = vunpack.c.h.b16 %v263
    %v377 = vunpack.c.l.b16 %v264
    %v378 = vunpack.c.h.b16 %v264
    %v379 = vunpack.c.l.b16 %v265
    %v380 = vunpack.c.h.b16 %v265
    %v381 = vunpack.c.l.b16 %v266
    %v382 = vunpack.c.h.b16 %v266
    %v383 = vunpack.c.l.b16 %v267
    %v384 = vunpack.c.h.b16 %v267
    %v385 = vunpack.c.l.b16 %v268
    %v386 = vunpack.c.h.b16 %v268
    %v387 = vunpack.c.l.b16 %v269
    %v388 = vunpack.c.h.b16 %v269
    %v389 = vunpack.c.l.b16 %v270
    %v390 = vunpack.c.h.b16 %v270
    %v391 = vunpack.c.l.b16 %v271
    %v392 = vunpack.c.h.b16 %v271
    %v393 = vunpack.c.l.b16 %v272
    %v394 = vunpack.c.h.b16 %v272
    %v395 = vunpack.c.l.b16 %v273
    %v396 = vunpack.c.h.b16 %v273
    %v397 = vunpack.c.l.b16 %v274
    %v398 = vunpack.c.h.b16 %v274
    %v399 = vpack.c.b16 %v339, %v335
    %v400 = vpack.c.b16 %v340, %v336
    %v401 = vpack.c.b16 %v341, %v337
    %v402 = vpack.c.b16 %v342, %v338
    %v403 = vpack.c.b16 %v347, %v343
    %v404 = vpack.c.b16 %v348, %v344
    %v405 = vpack.c.b16 %v349, %v345
    %v406 = vpack.c.b16 %v350, %v346
    %v407 = vpack.c.b16 %v355, %v351
    %v408 = vpack.c.b16 %v356, %v352
    %v409 = vpack.c.b16 %v357, %v353
    %v410 = vpack.c.b16 %v358, %v354
    %v411 = vpack.c.b16 %v363, %v359
    %v412 = vpack.c.b16 %v364, %v360
    %v413 = vpack.c.b16 %v365, %v361
    %v414 = vpack.c.b16 %v366, %v362
    %v415 = vpack.c.b16 %v371, %v367
    %v416 = vpack.c.b16 %v372, %v368
    %v417 = vpack.c.b16 %v373, %v369
    %v418 = vpack.c.b16 %v374, %v370
    %v419 = vpack.c.b16 %v379, %v375
    %v420 = vpack.c.b16 %v380, %v376
    %v421 = vpack.c.b16 %v381, %v377
    %v422 = vpack.c.b16 %v382, %v378
    %v423 = vpack.c.b16 %v387, %v383
    %v424 = vpack.c.b16 %v388, %v384
    %v425 = vpack.c.b16 %v389, %v385
    %v426 = vpack.c.b16 %v390, %v386
    %v427 = vpack.c.b16 %v395, %v391
    %v428 = vpack.c.b16 %v396, %v392
    %v429 = vpack.c.b16 %v397, %v393
    %v430 = vpack.c.b16 %v398, %v394
    %463 = vmatprep.subr.bf16.mxu0 %v428
    %464 = vmatpush1.bf16.msra.mxu0 %v427
    %465 = vmatprep.subr.bf16.mxu0 %v424
    %466 = vmatpush1.bf16.msra.mxu0 %v423
    %467 = vmatprep.subr.bf16.mxu0 %v420
    %468 = vmatpush1.bf16.msra.mxu0 %v419
    %469 = vmatprep.subr.bf16.mxu0 %v416
    %470 = vmatpush1.bf16.msra.mxu0 %v415
    %471 = vmatprep.subr.bf16.mxu0 %v412
    %472 = vmatpush1.bf16.msra.mxu0 %v411
    %473 = vmatprep.subr.bf16.mxu0 %v408
    %474 = vmatpush1.bf16.msra.mxu0 %v407
    %475 = vmatprep.subr.bf16.mxu0 %v404
    %476 = vmatpush1.bf16.msra.mxu0 %v403
    %477 = vmatprep.subr.bf16.mxu0 %v400
    %478 = vmatpush1.bf16.msra.mxu0 %v399
    %479 = vmatprep.subr.bf16.mxu0 0
    %480 = vmatpush2.bf16.msra.mxu0 0
    %481 = vmatprep.subr.bf16.mxu0 0
    %482 = vmatpush2.bf16.msra.mxu0 0
    %483 = vmatprep.subr.bf16.mxu0 0
    %484 = vmatpush2.bf16.msra.mxu0 0
    %485 = vmatprep.subr.bf16.mxu0 0
    %486 = vmatpush2.bf16.msra.mxu0 0
    %487 = vmatprep.subr.bf16.mxu0 0
    %488 = vmatpush2.bf16.msra.mxu0 0
    %489 = vmatprep.subr.bf16.mxu0 0
    %490 = vmatpush2.bf16.msra.mxu0 0
    %491 = vmatprep.subr.bf16.mxu0 0
    %492 = vmatpush2.bf16.msra.mxu0 0
    %493 = vmatprep.subr.bf16.mxu0 0
    %494 = vmatpush2.bf16.msra.mxu0 0
    %495 = vmatprep.mubr.bf16.mxu0 0
    %496 = vmatmul.mubr.bf16.gmra.mxu0 %v301
    %v497 = vpop.f32.mrf.mxu0
    %v498 = vadd.f32 %v280, %v497
    %v499 = vpop.f32.mrf.mxu0
    %v500 = vadd.f32 %v284, %v499
    %v501 = vpop.f32.mrf.mxu0
    %v502 = vadd.f32 %v280, %v501
    %v503 = vpop.f32.mrf.mxu0
    %v504 = vadd.f32 %v284, %v503
    %505 = vdwg.mxu0
    %506 = vmatprep.subr.bf16.mxu0 %v430
    %507 = vmatpush1.bf16.msra.mxu0 %v429
    %508 = vmatprep.subr.bf16.mxu0 %v426
    %509 = vmatpush1.bf16.msra.mxu0 %v425
    %510 = vmatprep.subr.bf16.mxu0 %v422
    %511 = vmatpush1.bf16.msra.mxu0 %v421
    %512 = vmatprep.subr.bf16.mxu0 %v418
    %513 = vmatpush1.bf16.msra.mxu0 %v417
    %514 = vmatprep.subr.bf16.mxu0 %v414
    %515 = vmatpush1.bf16.msra.mxu0 %v413
    %516 = vmatprep.subr.bf16.mxu0 %v410
    %517 = vmatpush1.bf16.msra.mxu0 %v409
    %518 = vmatprep.subr.bf16.mxu0 %v406
    %519 = vmatpush1.bf16.msra.mxu0 %v405
    %520 = vmatprep.subr.bf16.mxu0 %v402
    %521 = vmatpush1.bf16.msra.mxu0 %v401
    %522 = vmatprep.subr.bf16.mxu0 0
    %523 = vmatpush2.bf16.msra.mxu0 0
    %524 = vmatprep.subr.bf16.mxu0 0
    %525 = vmatpush2.bf16.msra.mxu0 0
    %526 = vmatprep.subr.bf16.mxu0 0
    %527 = vmatpush2.bf16.msra.mxu0 0
    %528 = vmatprep.subr.bf16.mxu0 0
    %529 = vmatpush2.bf16.msra.mxu0 0
    %530 = vmatprep.subr.bf16.mxu0 0
    %531 = vmatpush2.bf16.msra.mxu0 0
    %532 = vmatprep.subr.bf16.mxu0 0
    %533 = vmatpush2.bf16.msra.mxu0 0
    %534 = vmatprep.subr.bf16.mxu0 0
    %535 = vmatpush2.bf16.msra.mxu0 0
    %536 = vmatprep.subr.bf16.mxu0 0
    %537 = vmatpush2.bf16.msra.mxu0 0
    %538 = vmatprep.mubr.bf16.mxu0 0
    %539 = vmatmul.mubr.bf16.gmra.mxu0 %v301
    %v540 = vpop.f32.mrf.mxu0
    %v541 = vadd.f32 %v288, %v540
    %v542 = vpop.f32.mrf.mxu0
    %v543 = vadd.f32 %v292, %v542
    %v544 = vpop.f32.mrf.mxu0
    %v545 = vadd.f32 %v288, %v544
    %v546 = vpop.f32.mrf.mxu0
    %v547 = vadd.f32 %v292, %v546
    %548 = vdwg.mxu0
    %549 = vst [vmem:[#allocation8] sm:$0xff] %v498
    %550 = vst [vmem:[#allocation8 + $0x8] sm:$0xff] %v500
    %551 = vst [vmem:[#allocation8 + $0x10] sm:$0xff] %v541
    %552 = vst [vmem:[#allocation8 + $0x18] sm:$0xff] %v543
    %553 = vst [vmem:[#allocation8 + $0x20] sm:$0xff] %v502
    %554 = vst [vmem:[#allocation8 + $0x28] sm:$0xff] %v504
    %555 = vst [vmem:[#allocation8 + $0x30] sm:$0xff] %v545
    %556 = vst [vmem:[#allocation8 + $0x38] sm:$0xff] %v547
    // Predicated region
    $region42: #{bert_lm_prediction_head.1} parent=1 // pred_check
      _
    $region43: #{bert_lm_prediction_head.1} parent=1 // pred_check_branch
      %558 = sbr.rel (0) target = $region45
    $region44: #{bert_lm_prediction_head.1} parent=1 // pred_region
      %s560 = ssub.s32 1024, 1024
      %561 = vsyncadd [#allocation5], %s560
      %s562 = sshll.u32 [#allocation8], 4
      %s563 = int_to_ptr.vmem [resolvable:$true] %s562
      %568 = dma.vmem_to_hbm [thread:$0]  %s563, 1024, %s7, [#allocation5], 512, 512, 32
    $region45: #{bert_lm_prediction_head.1} parent=1 // pred_fallthru
      _
    // Predicated region
    $region46: #{bert_lm_prediction_head.1} parent=1 // pred_check
      _
    $region47: #{bert_lm_prediction_head.1} parent=1 // pred_check_branch
      %570 = sbr.rel (0) target = $region49
    $region48: #{bert_lm_prediction_head.1} parent=1 // pred_region
      %571 = dma.done [#allocation5], 1024
    $region49: #{bert_lm_prediction_head.1} parent=1 // pred_fallthru
      _
    %572 = vsyncpa [#allocation4], 1
    %573 = vsyncpa [#allocation7], 1
    %574 = vsyncpa [#allocation5], 1

</llo_original>
